<compile_context>
chip_gen: v7x
topology: tpu7x:2x2x1
jax: 0.10.0
libtpu: 0.0.40
codegen_flags: <defaults>
</compile_context>

<pallas_src>
import jax
import jax.numpy as jnp
from jax.experimental import pallas as pl
from jax.experimental.pallas import tpu as pltpu

SIZES = [120, 240, 64, 3]
N_CLASSES = SIZES[-1]
H1_PAD = 256        # 240 -> 256 (clean lanes / MXU tiles)
OUT_PAD = 8         # 3 -> 8 output lanes (smallest legal full-array last dim)
MAX_TILE_B = 4096   # ~14 MiB VMEM live; safe on v7x (64 MiB), v6e/v5e (128 MiB)


def _round_up(x, m):
    return ((x + m - 1) // m) * m


def _pad2(a, rows, cols):
    return jnp.pad(a, ((0, rows - a.shape[0]), (0, cols - a.shape[1])))


def denseff_kernel(x_ref, w1_ref, b1_ref, w2_ref, b2_ref, w3_ref, b3_ref, o_ref):
    # Whole MLP for one (tb, 120) row tile: bf16 MXU operands, f32 accumulation.
    x = x_ref[...].astype(jnp.bfloat16)                                   # cast in-kernel (VPU, hidden under DMA)
    h = jnp.dot(x, w1_ref[...], preferred_element_type=jnp.float32) + b1_ref[...]
    h = jnp.maximum(h, 0.0)                                               # ReLU (layer 1)
    h = jnp.dot(h.astype(jnp.bfloat16), w2_ref[...],
                preferred_element_type=jnp.float32) + b2_ref[...]
    h = jnp.maximum(h, 0.0)                                               # ReLU (layer 2)
    h = jnp.dot(h.astype(jnp.bfloat16), w3_ref[...],
                preferred_element_type=jnp.float32) + b3_ref[...]
    h = jnp.maximum(h, 0.0)                                               # ReLU (layer 3, per reference loop)

    # Output lanes padded 3 -> 8: mask padded lanes out of the softmax.
    lane = jax.lax.broadcasted_iota(jnp.int32, h.shape, dimension=1)
    h = jnp.where(lane < N_CLASSES, h, -jnp.inf)

    m = jnp.max(h, axis=-1, keepdims=True)
    e = jnp.exp(h - m)                                                    # exp(-inf) -> 0 in padded lanes
    s = jnp.sum(e, axis=-1, keepdims=True)
    o_ref[...] = e * pl.reciprocal(s, approx=False)
    # TODO(synk): dropout layers are identity at inference; training-mode dropout not implemented.


def denseff_forward(x, params, *, tile_b=MAX_TILE_B):
    B, F_in = x.shape
    assert F_in == SIZES[0]
    (w1, b1), (w2, b2), (w3, b3) = params

    # Small one-time weight padding (done once in the wrapper; x itself is NOT touched).
    w1p = _pad2(w1, SIZES[0], H1_PAD).astype(jnp.bfloat16)     # (120, 256)
    b1p = _pad2(b1, 1, H1_PAD)                                 # (1, 256) f32
    w2p = _pad2(w2, H1_PAD, SIZES[2]).astype(jnp.bfloat16)     # (256, 64)
    b2p = b2                                                   # (1, 64)  f32
    w3p = _pad2(w3, SIZES[2], OUT_PAD).astype(jnp.bfloat16)    # (64, 8)
    b3p = _pad2(b3, 1, OUT_PAD)                                # (1, 8)   f32

    # Row tile: as large as VMEM comfortably allows, always a multiple of 8.
    tb = min(max(int(tile_b), 8), MAX_TILE_B, _round_up(B, 8))
    tb = _round_up(tb, 8)
    grid = (pl.cdiv(B, tb),)   # ragged trailing block handled by Pallas (OOB writes masked)

    out = pl.pallas_call(
        denseff_kernel,
        out_shape=jax.ShapeDtypeStruct((B, OUT_PAD), jnp.float32),
        grid_spec=pltpu.PrefetchScalarGridSpec(
            num_scalar_prefetch=0,
            grid=grid,
            in_specs=[
                pl.BlockSpec((tb, SIZES[0]), lambda i: (i, 0)),   # x tile, raw f32 (full last dim)
                pl.BlockSpec(w1p.shape, lambda i: (0, 0)),        # W1 [120,256] bf16
                pl.BlockSpec(b1p.shape, lambda i: (0, 0)),        # b1 [1,256]  f32
                pl.BlockSpec(w2p.shape, lambda i: (0, 0)),        # W2 [256,64] bf16
                pl.BlockSpec(b2p.shape, lambda i: (0, 0)),        # b2 [1,64]   f32
                pl.BlockSpec(w3p.shape, lambda i: (0, 0)),        # W3 [64,8]   bf16
                pl.BlockSpec(b3p.shape, lambda i: (0, 0)),        # b3 [1,8]    f32
            ],
            out_specs=pl.BlockSpec((tb, OUT_PAD), lambda i: (i, 0)),   # (tb, 8) f32 writeback
        ),
        compiler_params=pltpu.CompilerParams(
            dimension_semantics=("parallel",),
            vmem_limit_bytes=32 * 1024 * 1024,
        ),
    )(x, w1p, b1p, w2p, b2p, w3p, b3p)

    return out[:, :N_CLASSES], None


def init_params(key, sizes=SIZES):
    """Deterministic Xavier-uniform weights (stored [in,out]) and zero biases."""
    params = []
    for i in range(1, len(sizes)):
        fan_in, fan_out = sizes[i - 1], sizes[i]
        key, sub = jax.random.split(key)
        bound = (6.0 / (fan_in + fan_out)) ** 0.5
        w = jax.random.uniform(sub, (fan_in, fan_out), jnp.float32, -bound, bound)
        b = jnp.zeros((1, fan_out), jnp.float32)
        params.append((w, b))
    return params


def denseff_reference(x, params):
    """Pure-JAX reference emulating the kernel's bf16-operand / f32-accumulate matmuls."""
    h = x
    for w, b in params:
        h = jnp.dot(h.astype(jnp.bfloat16), w.astype(jnp.bfloat16),
                    preferred_element_type=jnp.float32) + b
        h = jnp.maximum(h, 0.0)
    return jax.nn.softmax(h, axis=-1), None


if __name__ == "__main__":
    key = jax.random.PRNGKey(0)
    kx, kp = jax.random.split(key)
    B = 100  # intentionally NOT a multiple of 8 / tile -> exercises the ragged trailing block
    x = jax.random.normal(kx, (B, SIZES[0]), jnp.float32)
    params = init_params(kp)

    out, aux = denseff_forward(x, params)
    out = jax.block_until_ready(out)

    ref, _ = denseff_reference(x, params)
    assert out.shape == (B, SIZES[-1])
    assert aux is None
    assert bool(jnp.all(jnp.isfinite(out)))
    assert jnp.allclose(jnp.sum(out, axis=-1), 1.0, atol=1e-5), "softmax rows must sum to 1"
    assert jnp.allclose(out, ref, atol=1e-4, rtol=1e-4), "mismatch vs bf16-emulating reference"
    print("KERNEL_OK")
</pallas_src>

<mosaic_0001>
module attributes {stable_mosaic.version = 11 : i64} {
  func.func @denseff_kernel(%arg0: i32, %arg1: memref<104x120xf32, #tpu.memory_space<vmem>>, %arg2: memref<120x256xbf16, #tpu.memory_space<vmem>>, %arg3: memref<1x256xf32, #tpu.memory_space<vmem>>, %arg4: memref<256x64xbf16, #tpu.memory_space<vmem>>, %arg5: memref<1x64xf32, #tpu.memory_space<vmem>>, %arg6: memref<64x8xbf16, #tpu.memory_space<vmem>>, %arg7: memref<1x8xf32, #tpu.memory_space<vmem>>, %arg8: memref<104x8xf32, #tpu.memory_space<vmem>>) attributes {dimension_semantics = [#tpu.dimension_semantics<parallel>], iteration_bounds = array<i64: 1>, scalar_prefetch = 0 : i64, scratch_operands = 0 : i64, tpu.core_type = #tpu.core_type<tc>, window_params = [{transform_indices = @transform_0, window_bounds = array<i64: 104, 120>}, {pipeline_mode = #tpu.pipeline_mode<synchronous>, transform_indices = @transform_1, window_bounds = array<i64: 120, 256>}, {pipeline_mode = #tpu.pipeline_mode<synchronous>, transform_indices = @transform_2, window_bounds = array<i64: 1, 256>}, {pipeline_mode = #tpu.pipeline_mode<synchronous>, transform_indices = @transform_3, window_bounds = array<i64: 256, 64>}, {pipeline_mode = #tpu.pipeline_mode<synchronous>, transform_indices = @transform_4, window_bounds = array<i64: 1, 64>}, {pipeline_mode = #tpu.pipeline_mode<synchronous>, transform_indices = @transform_5, window_bounds = array<i64: 64, 8>}, {pipeline_mode = #tpu.pipeline_mode<synchronous>, transform_indices = @transform_6, window_bounds = array<i64: 1, 8>}, {transform_indices = @transform_7, window_bounds = array<i64: 104, 8>}]} {
    %c0 = arith.constant 0 : index
    %c0_0 = arith.constant 0 : index
    %0 = vector.load %arg1[%c0, %c0_0] : memref<104x120xf32, #tpu.memory_space<vmem>>, vector<104x120xf32>
    %1 = arith.truncf %0 : vector<104x120xf32> to vector<104x120xbf16>
    %c0_1 = arith.constant 0 : index
    %c0_2 = arith.constant 0 : index
    %2 = vector.load %arg2[%c0_1, %c0_2] : memref<120x256xbf16, #tpu.memory_space<vmem>>, vector<120x256xbf16>
    %cst = arith.constant dense<0.000000e+00> : vector<104x256xf32>
    %3 = tpu.matmul %1, %2, %cst {dimension_numbers = #tpu.dot_dimension_numbers<[1], [0], [0], [1], [0, 0, 1, 1], [], []>} : vector<104x120xbf16>, vector<120x256xbf16>, vector<104x256xf32> -> vector<104x256xf32>
    %c0_3 = arith.constant 0 : index
    %c0_4 = arith.constant 0 : index
    %4 = vector.load %arg3[%c0_3, %c0_4] : memref<1x256xf32, #tpu.memory_space<vmem>>, vector<1x256xf32>
    %5 = vector.broadcast %4 : vector<1x256xf32> to vector<104x256xf32>
    %6 = arith.addf %3, %5 : vector<104x256xf32>
    %cst_5 = arith.constant 0.000000e+00 : f32
    %7 = vector.broadcast %cst_5 : f32 to vector<104x256xf32>
    %8 = arith.maximumf %6, %7 : vector<104x256xf32>
    %9 = arith.truncf %8 : vector<104x256xf32> to vector<104x256xbf16>
    %c0_6 = arith.constant 0 : index
    %c0_7 = arith.constant 0 : index
    %10 = vector.load %arg4[%c0_6, %c0_7] : memref<256x64xbf16, #tpu.memory_space<vmem>>, vector<256x64xbf16>
    %cst_8 = arith.constant dense<0.000000e+00> : vector<104x64xf32>
    %11 = tpu.matmul %9, %10, %cst_8 {dimension_numbers = #tpu.dot_dimension_numbers<[1], [0], [0], [1], [0, 0, 1, 1], [], []>} : vector<104x256xbf16>, vector<256x64xbf16>, vector<104x64xf32> -> vector<104x64xf32>
    %c0_9 = arith.constant 0 : index
    %c0_10 = arith.constant 0 : index
    %12 = vector.load %arg5[%c0_9, %c0_10] : memref<1x64xf32, #tpu.memory_space<vmem>>, vector<1x64xf32>
    %13 = vector.broadcast %12 : vector<1x64xf32> to vector<104x64xf32>
    %14 = arith.addf %11, %13 : vector<104x64xf32>
    %cst_11 = arith.constant 0.000000e+00 : f32
    %15 = vector.broadcast %cst_11 : f32 to vector<104x64xf32>
    %16 = arith.maximumf %14, %15 : vector<104x64xf32>
    %17 = arith.truncf %16 : vector<104x64xf32> to vector<104x64xbf16>
    %c0_12 = arith.constant 0 : index
    %c0_13 = arith.constant 0 : index
    %18 = vector.load %arg6[%c0_12, %c0_13] : memref<64x8xbf16, #tpu.memory_space<vmem>>, vector<64x8xbf16>
    %cst_14 = arith.constant dense<0.000000e+00> : vector<104x8xf32>
    %19 = tpu.matmul %17, %18, %cst_14 {dimension_numbers = #tpu.dot_dimension_numbers<[1], [0], [0], [1], [0, 0, 1, 1], [], []>} : vector<104x64xbf16>, vector<64x8xbf16>, vector<104x8xf32> -> vector<104x8xf32>
    %c0_15 = arith.constant 0 : index
    %c0_16 = arith.constant 0 : index
    %20 = vector.load %arg7[%c0_15, %c0_16] : memref<1x8xf32, #tpu.memory_space<vmem>>, vector<1x8xf32>
    %21 = vector.broadcast %20 : vector<1x8xf32> to vector<104x8xf32>
    %22 = arith.addf %19, %21 : vector<104x8xf32>
    %cst_17 = arith.constant 0.000000e+00 : f32
    %23 = vector.broadcast %cst_17 : f32 to vector<104x8xf32>
    %24 = arith.maximumf %22, %23 : vector<104x8xf32>
    %25 = tpu.iota {dimensions = array<i32: 1>} : vector<104x8xi32>
    %c3_i32 = arith.constant 3 : i32
    %26 = vector.broadcast %c3_i32 : i32 to vector<104x8xi32>
    %27 = arith.cmpi slt, %25, %26 : vector<104x8xi32>
    %cst_18 = arith.constant 0xFF800000 : f32
    %28 = vector.broadcast %cst_18 : f32 to vector<104x8xf32>
    %29 = arith.select %27, %24, %28 : vector<104x8xi1>, vector<104x8xf32>
    %cst_19 = arith.constant dense<0xFF800000> : vector<104xf32>
    %30 = vector.multi_reduction <maximumf>, %29, %cst_19 [1] : vector<104x8xf32> to vector<104xf32>
    %31 = vector.shape_cast %30 : vector<104xf32> to vector<104x1xf32>
    %32 = vector.broadcast %31 : vector<104x1xf32> to vector<104x8xf32>
    %33 = arith.subf %29, %32 : vector<104x8xf32>
    %34 = math.exp %33 : vector<104x8xf32>
    %cst_20 = arith.constant dense<0.000000e+00> : vector<104xf32>
    %35 = vector.multi_reduction <add>, %34, %cst_20 [1] : vector<104x8xf32> to vector<104xf32>
    %36 = vector.shape_cast %35 : vector<104xf32> to vector<104x1xf32>
    %37 = tpu.reciprocal %36 : vector<104x1xf32> -> vector<104x1xf32>
    %38 = vector.broadcast %37 : vector<104x1xf32> to vector<104x8xf32>
    %39 = arith.mulf %34, %38 : vector<104x8xf32>
    %c0_21 = arith.constant 0 : index
    %c0_22 = arith.constant 0 : index
    %40 = vector.load %arg8[%c0_21, %c0_22] : memref<104x8xf32, #tpu.memory_space<vmem>>, vector<104x8xf32>
    tpu.vector_store %arg8[%c0_21, %c0_22], %39 {strides = array<i32>} : memref<104x8xf32, #tpu.memory_space<vmem>>, vector<104x8xf32>,
    return
  }
  func.func @transform_0(%arg0: i32) -> (i32, i32) {
    %c0_i32 = arith.constant 0 : i32
    %c0_i32_0 = arith.constant 0 : i32
    return %arg0, %c0_i32 : i32, i32
  }
  func.func @transform_1(%arg0: i32) -> (i32, i32) {
    %c0_i32 = arith.constant 0 : i32
    %c0_i32_0 = arith.constant 0 : i32
    %c0_i32_1 = arith.constant 0 : i32
    return %c0_i32, %c0_i32_0 : i32, i32
  }
  func.func @transform_2(%arg0: i32) -> (i32, i32) {
    %c0_i32 = arith.constant 0 : i32
    %c0_i32_0 = arith.constant 0 : i32
    %c0_i32_1 = arith.constant 0 : i32
    return %c0_i32, %c0_i32_0 : i32, i32
  }
  func.func @transform_3(%arg0: i32) -> (i32, i32) {
    %c0_i32 = arith.constant 0 : i32
    %c0_i32_0 = arith.constant 0 : i32
    %c0_i32_1 = arith.constant 0 : i32
    return %c0_i32, %c0_i32_0 : i32, i32
  }
  func.func @transform_4(%arg0: i32) -> (i32, i32) {
    %c0_i32 = arith.constant 0 : i32
    %c0_i32_0 = arith.constant 0 : i32
    %c0_i32_1 = arith.constant 0 : i32
    return %c0_i32, %c0_i32_0 : i32, i32
  }
  func.func @transform_5(%arg0: i32) -> (i32, i32) {
    %c0_i32 = arith.constant 0 : i32
    %c0_i32_0 = arith.constant 0 : i32
    %c0_i32_1 = arith.constant 0 : i32
    return %c0_i32, %c0_i32_0 : i32, i32
  }
  func.func @transform_6(%arg0: i32) -> (i32, i32) {
    %c0_i32 = arith.constant 0 : i32
    %c0_i32_0 = arith.constant 0 : i32
    %c0_i32_1 = arith.constant 0 : i32
    return %c0_i32, %c0_i32_0 : i32, i32
  }
  func.func @transform_7(%arg0: i32) -> (i32, i32) {
    %c0_i32 = arith.constant 0 : i32
    %c0_i32_0 = arith.constant 0 : i32
    return %arg0, %c0_i32 : i32, i32
  }
}

</mosaic_0001>

<llo_original>
// kernel: tpu_custom_call.1
$region0: #{tpu_custom_call.1}
  #allocation0 [shape = 'u32[]', space=smem, size = 0x4, offset = 0x4, fixed_abs, tag = 'smem constant byte address 0x4 - core index']
  #allocation1 [shape = 'u32[144,128]{1,0:T(1,128)}', space=vmem, size = 0x12000, scoped, tag = 'internal scratch']
  %s0 = inlined_call_operand.vmem [shape: f32[100,120], index: 0, kind: input, shape index: {}]
  %s1 = inlined_call_operand.vmem [shape: bf16[120,256], index: 1, kind: input, shape index: {}]
  %s2 = inlined_call_operand.vmem [shape: f32[1,256], index: 2, kind: input, shape index: {}]
  %s3 = inlined_call_operand.vmem [shape: bf16[256,64], index: 3, kind: input, shape index: {}]
  %s4 = inlined_call_operand.vmem [shape: f32[1,64], index: 4, kind: input, shape index: {}]
  %s5 = inlined_call_operand.vmem [shape: bf16[64,8], index: 5, kind: input, shape index: {}]
  %s6 = inlined_call_operand.vmem [shape: f32[1,8], index: 6, kind: input, shape index: {}]
  %s7 = inlined_call_operand.vmem [shape: f32[100,8], index: 7, kind: output, shape index: {}]
  %s8 = sld [smem:[#allocation0]]
  $region38: #{tpu_custom_call.1} parent=0
    _
  %s10 = ssub.s32 1, %s8
  %s11 = scalar_select 0, %s10, %s8
  // Predicated region
  $region2: #{tpu_custom_call.1} parent=0 // pred_check
    _
  $region3: #{tpu_custom_call.1} parent=0 // pred_check_branch
    %13 = sbr.rel (0) target = $region5
  $region4: #{tpu_custom_call.1} parent=0 // pred_region
    _
  $region5: #{tpu_custom_call.1} parent=0 // pred_fallthru
    _
  // Predicated region
  $region6: #{tpu_custom_call.1} parent=0 // pred_check
    _
  $region7: #{tpu_custom_call.1} parent=0 // pred_check_branch
    %15 = sbr.rel (0) target = $region9
  $region8: #{tpu_custom_call.1} parent=0 // pred_region
    _
  $region9: #{tpu_custom_call.1} parent=0 // pred_fallthru
    _
  // Predicated region
  $region10: #{tpu_custom_call.1} parent=0 // pred_check
    _
  $region11: #{tpu_custom_call.1} parent=0 // pred_check_branch
    %17 = sbr.rel (0) target = $region13
  $region12: #{tpu_custom_call.1} parent=0 // pred_region
    _
  $region13: #{tpu_custom_call.1} parent=0 // pred_fallthru
    _
  // Predicated region
  $region14: #{tpu_custom_call.1} parent=0 // pred_check
    _
  $region15: #{tpu_custom_call.1} parent=0 // pred_check_branch
    %19 = sbr.rel (0) target = $region17
  $region16: #{tpu_custom_call.1} parent=0 // pred_region
    _
  $region17: #{tpu_custom_call.1} parent=0 // pred_fallthru
    _
  // Predicated region
  $region18: #{tpu_custom_call.1} parent=0 // pred_check
    _
  $region19: #{tpu_custom_call.1} parent=0 // pred_check_branch
    %21 = sbr.rel (0) target = $region21
  $region20: #{tpu_custom_call.1} parent=0 // pred_region
    _
  $region21: #{tpu_custom_call.1} parent=0 // pred_fallthru
    _
  // Predicated region
  $region22: #{tpu_custom_call.1} parent=0 // pred_check
    _
  $region23: #{tpu_custom_call.1} parent=0 // pred_check_branch
    %23 = sbr.rel (0) target = $region25
  $region24: #{tpu_custom_call.1} parent=0 // pred_region
    _
  $region25: #{tpu_custom_call.1} parent=0 // pred_fallthru
    _
  // Predicated region
  $region26: #{tpu_custom_call.1} parent=0 // pred_check
    _
  $region27: #{tpu_custom_call.1} parent=0 // pred_check_branch
    %25 = sbr.rel (0) target = $region29
  $region28: #{tpu_custom_call.1} parent=0 // pred_region
    _
  $region29: #{tpu_custom_call.1} parent=0 // pred_fallthru
    _
  %v27 = vld [vmem:[%s0] sm:$0xff]
  %v28 = vld [vmem:[%s0 + $0x8] sm:$0xff]
  %v29 = vld [vmem:[%s0 + $0x10] sm:$0xff]
  %v30 = vld [vmem:[%s0 + $0x18] sm:$0xff]
  %v31 = vld [vmem:[%s0 + $0x20] sm:$0xff]
  %v32 = vld [vmem:[%s0 + $0x28] sm:$0xff]
  %v33 = vld [vmem:[%s0 + $0x30] sm:$0xff]
  %v34 = vld [vmem:[%s0 + $0x38] sm:$0xff]
  %v35 = vld [vmem:[%s0 + $0x40] sm:$0xff]
  %v36 = vld [vmem:[%s0 + $0x48] sm:$0xff]
  %v37 = vld [vmem:[%s0 + $0x50] sm:$0xff]
  %v38 = vld [vmem:[%s0 + $0x58] sm:$0xff]
  %v39 = vld [vmem:[%s0 + $0x60] sm:$0xff]
  %v40 = vpack.c.bf16 %v28, %v27
  %v41 = vpack.c.bf16 %v30, %v29
  %v42 = vpack.c.bf16 %v32, %v31
  %v43 = vpack.c.bf16 %v34, %v33
  %v44 = vpack.c.bf16 %v36, %v35
  %v45 = vpack.c.bf16 %v38, %v37
  %v46 = vpack.c.bf16 %v39, %v39
  %v47 = vld [vmem:[%s1] sm:$0xff]
  %v48 = vld [vmem:[%s1 + $0x8] sm:$0xff]
  %v49 = vld [vmem:[%s1 + $0x10] sm:$0xff]
  %v50 = vld [vmem:[%s1 + $0x18] sm:$0xff]
  %v51 = vld [vmem:[%s1 + $0x20] sm:$0xff]
  %v52 = vld [vmem:[%s1 + $0x28] sm:$0xff]
  %v53 = vld [vmem:[%s1 + $0x30] sm:$0xff]
  %v54 = vld [vmem:[%s1 + $0x38] sm:$0xff]
  %v55 = vld [vmem:[%s1 + $0x40] sm:$0xff]
  %v56 = vld [vmem:[%s1 + $0x48] sm:$0xff]
  %v57 = vld [vmem:[%s1 + $0x50] sm:$0xff]
  %v58 = vld [vmem:[%s1 + $0x58] sm:$0xff]
  %v59 = vld [vmem:[%s1 + $0x60] sm:$0xff]
  %v60 = vld [vmem:[%s1 + $0x68] sm:$0xff]
  %v61 = vld [vmem:[%s1 + $0x70] sm:$0xff]
  %v62 = vld [vmem:[%s2] sm:$0x3]
  %v64 = vlaneseq
  %v65 = vshrl.u32 %v64, 7
  %v66 = vsub.s32 0, %v65
  %v67 = vrot.slane %v62, %v66
  %v68 = vlaneseq
  %v69 = vshrl.u32 %v68, 7
  %v70 = vsub.s32 1, %v69
  %v71 = vrot.slane %v62, %v70
  %v89 = vunpack.c.l.b16 %v47
  %v90 = vunpack.c.h.b16 %v47
  %v91 = vunpack.c.l.b16 %v48
  %v92 = vunpack.c.h.b16 %v48
  %v93 = vunpack.c.l.b16 %v49
  %v94 = vunpack.c.h.b16 %v49
  %v95 = vunpack.c.l.b16 %v50
  %v96 = vunpack.c.h.b16 %v50
  %v97 = vunpack.c.l.b16 %v51
  %v98 = vunpack.c.h.b16 %v51
  %v99 = vunpack.c.l.b16 %v52
  %v100 = vunpack.c.h.b16 %v52
  %v101 = vunpack.c.l.b16 %v53
  %v102 = vunpack.c.h.b16 %v53
  %v103 = vunpack.c.l.b16 %v54
  %v104 = vunpack.c.h.b16 %v54
  %v105 = vunpack.c.l.b16 %v55
  %v106 = vunpack.c.h.b16 %v55
  %v107 = vunpack.c.l.b16 %v56
  %v108 = vunpack.c.h.b16 %v56
  %v109 = vunpack.c.l.b16 %v57
  %v110 = vunpack.c.h.b16 %v57
  %v111 = vunpack.c.l.b16 %v58
  %v112 = vunpack.c.h.b16 %v58
  %v113 = vunpack.c.l.b16 %v59
  %v114 = vunpack.c.h.b16 %v59
  %v115 = vunpack.c.l.b16 %v60
  %v116 = vunpack.c.h.b16 %v60
  %v117 = vunpack.c.l.b16 %v61
  %v118 = vunpack.c.h.b16 %v61
  %v119 = vpack.c.b16 %v91, %v89
  %v120 = vpack.c.b16 %v92, %v90
  %v121 = vpack.c.b16 %v95, %v93
  %v122 = vpack.c.b16 %v96, %v94
  %v123 = vpack.c.b16 %v99, %v97
  %v124 = vpack.c.b16 %v100, %v98
  %v125 = vpack.c.b16 %v103, %v101
  %v126 = vpack.c.b16 %v104, %v102
  %v127 = vpack.c.b16 %v107, %v105
  %v128 = vpack.c.b16 %v108, %v106
  %v129 = vpack.c.b16 %v111, %v109
  %v130 = vpack.c.b16 %v112, %v110
  %v131 = vpack.c.b16 %v115, %v113
  %v132 = vpack.c.b16 %v116, %v114
  %v133 = vpack.c.b16 %v117, %v117
  %v134 = vpack.c.b16 %v118, %v118
  %vm149 = vcmask 982016
  %v151 = vsel %vm149, %v40, 0
  %v154 = vsel %vm149, %v41, 0
  %v157 = vsel %vm149, %v42, 0
  %v160 = vsel %vm149, %v43, 0
  %v163 = vsel %vm149, %v44, 0
  %v166 = vsel %vm149, %v45, 0
  %v169 = vsel %vm149, %v46, 0
  %vm171 = vcmask 1043456
  %v173 = vsel %vm171, %v133, 0
  %v176 = vsel %vm171, %v134, 0
  %178 = vmatprep.subr.bf16.mxu0 %v120
  %179 = vmatpush1.bf16.msra.mxu0 %v119
  %180 = vmatprep.subr.bf16.mxu0 %v122
  %181 = vmatpush1.bf16.msra.mxu0 %v121
  %182 = vmatprep.subr.bf16.mxu0 %v124
  %183 = vmatpush1.bf16.msra.mxu0 %v123
  %184 = vmatprep.subr.bf16.mxu0 %v126
  %185 = vmatpush1.bf16.msra.mxu0 %v125
  %186 = vmatprep.subr.bf16.mxu0 %v128
  %187 = vmatpush1.bf16.msra.mxu0 %v127
  %188 = vmatprep.subr.bf16.mxu0 %v130
  %189 = vmatpush1.bf16.msra.mxu0 %v129
  %190 = vmatprep.subr.bf16.mxu0 %v132
  %191 = vmatpush1.bf16.msra.mxu0 %v131
  %192 = vmatprep.subr.bf16.mxu0 %v176
  %193 = vmatpush1.bf16.msra.mxu0 %v173
  %194 = vmatprep.subr.bf16.mxu0 0
  %195 = vmatpush1.bf16.msra.mxu0 0
  %196 = vmatprep.subr.bf16.mxu0 0
  %197 = vmatpush1.bf16.msra.mxu0 0
  %198 = vmatprep.subr.bf16.mxu0 0
  %199 = vmatpush1.bf16.msra.mxu0 0
  %200 = vmatprep.subr.bf16.mxu0 0
  %201 = vmatpush1.bf16.msra.mxu0 0
  %202 = vmatprep.subr.bf16.mxu0 0
  %203 = vmatpush1.bf16.msra.mxu0 0
  %204 = vmatprep.subr.bf16.mxu0 0
  %205 = vmatpush1.bf16.msra.mxu0 0
  %206 = vmatprep.subr.bf16.mxu0 0
  %207 = vmatpush1.bf16.msra.mxu0 0
  %208 = vmatprep.subr.bf16.mxu0 0
  %209 = vmatpush1.bf16.msra.mxu0 0
  %210 = vmatprep.mubr.bf16.mxu0 0
  %211 = vmatmul.mubr.bf16.gmra.mrb[0].mxu0 %v151
  %v212 = vpop.f32.mrb[0].mxu0
  %v213 = vadd.f32 %v67, %v212
  %v214 = vpop.f32.mrb[0].mxu0
  %v215 = vadd.f32 %v71, %v214
  %v216 = vpop.f32.mrb[0].mxu0
  %v217 = vadd.f32 %v67, %v216
  %v218 = vpop.f32.mrb[0].mxu0
  %v219 = vadd.f32 %v71, %v218
  %220 = vmatprep.mubr.bf16.mxu0 0
  %221 = vmatmul.mubr.bf16.gmra.mrb[0].mxu0 %v154
  %v222 = vpop.f32.mrb[0].mxu0
  %v223 = vadd.f32 %v67, %v222
  %v224 = vpop.f32.mrb[0].mxu0
  %v225 = vadd.f32 %v71, %v224
  %v226 = vpop.f32.mrb[0].mxu0
  %v227 = vadd.f32 %v67, %v226
  %v228 = vpop.f32.mrb[0].mxu0
  %v229 = vadd.f32 %v71, %v228
  %230 = vmatprep.mubr.bf16.mxu0 0
  %231 = vmatmul.mubr.bf16.gmra.mrb[0].mxu0 %v157
  %v232 = vpop.f32.mrb[0].mxu0
  %v233 = vadd.f32 %v67, %v232
  %v234 = vpop.f32.mrb[0].mxu0
  %v235 = vadd.f32 %v71, %v234
  %v236 = vpop.f32.mrb[0].mxu0
  %v237 = vadd.f32 %v67, %v236
  %v238 = vpop.f32.mrb[0].mxu0
  %v239 = vadd.f32 %v71, %v238
  %240 = vmatprep.mubr.bf16.mxu0 0
  %241 = vmatmul.mubr.bf16.gmra.mrb[0].mxu0 %v160
  %v242 = vpop.f32.mrb[0].mxu0
  %v243 = vadd.f32 %v67, %v242
  %v244 = vpop.f32.mrb[0].mxu0
  %v245 = vadd.f32 %v71, %v244
  %v246 = vpop.f32.mrb[0].mxu0
  %v247 = vadd.f32 %v67, %v246
  %v248 = vpop.f32.mrb[0].mxu0
  %v249 = vadd.f32 %v71, %v248
  %250 = vmatprep.mubr.bf16.mxu0 0
  %251 = vmatmul.mubr.bf16.gmra.mrb[0].mxu0 %v163
  %v252 = vpop.f32.mrb[0].mxu0
  %v253 = vadd.f32 %v67, %v252
  %v254 = vpop.f32.mrb[0].mxu0
  %v255 = vadd.f32 %v71, %v254
  %v256 = vpop.f32.mrb[0].mxu0
  %v257 = vadd.f32 %v67, %v256
  %v258 = vpop.f32.mrb[0].mxu0
  %v259 = vadd.f32 %v71, %v258
  %260 = vmatprep.mubr.bf16.mxu0 0
  %261 = vmatmul.mubr.bf16.gmra.mrb[0].mxu0 %v166
  %v262 = vpop.f32.mrb[0].mxu0
  %v263 = vadd.f32 %v67, %v262
  %v264 = vpop.f32.mrb[0].mxu0
  %v265 = vadd.f32 %v71, %v264
  %v266 = vpop.f32.mrb[0].mxu0
  %v267 = vadd.f32 %v67, %v266
  %v268 = vpop.f32.mrb[0].mxu0
  %v269 = vadd.f32 %v71, %v268
  %270 = vmatprep.mubr.bf16.mxu0 0
  %271 = vmatmul.mubr.bf16.gmra.mrb[0].mxu0 %v169
  %v272 = vpop.f32.mrb[0].mxu0
  %v273 = vadd.f32 %v67, %v272
  %v274 = vpop.f32.mrb[0].mxu0
  %v275 = vadd.f32 %v71, %v274
  %v276 = vpop.f32.mrb[0].mxu0
  %v277 = vpop.f32.mrb[0].mxu0
  %278 = vdwg.mxu0
  %v279 = vmax.f32 %v213, 0.0
  %v280 = vmax.f32 %v215, 0.0
  %v281 = vmax.f32 %v217, 0.0
  %v282 = vmax.f32 %v219, 0.0
  %v283 = vmax.f32 %v223, 0.0
  %v284 = vmax.f32 %v225, 0.0
  %v285 = vmax.f32 %v227, 0.0
  %v286 = vmax.f32 %v229, 0.0
  %v287 = vmax.f32 %v233, 0.0
  %v288 = vmax.f32 %v235, 0.0
  %v289 = vmax.f32 %v237, 0.0
  %v290 = vmax.f32 %v239, 0.0
  %v291 = vmax.f32 %v243, 0.0
  %v292 = vmax.f32 %v245, 0.0
  %v293 = vmax.f32 %v247, 0.0
  %v294 = vmax.f32 %v249, 0.0
  %v295 = vmax.f32 %v253, 0.0
  %v296 = vmax.f32 %v255, 0.0
  %v297 = vmax.f32 %v257, 0.0
  %v298 = vmax.f32 %v259, 0.0
  %v299 = vmax.f32 %v263, 0.0
  %v300 = vmax.f32 %v265, 0.0
  %v301 = vmax.f32 %v267, 0.0
  %v302 = vmax.f32 %v269, 0.0
  %v303 = vmax.f32 %v273, 0.0
  %v304 = vmax.f32 %v275, 0.0
  %v305 = vpack.c.bf16 %v281, %v279
  %v306 = vpack.c.bf16 %v282, %v280
  %v307 = vpack.c.bf16 %v285, %v283
  %v308 = vpack.c.bf16 %v286, %v284
  %v309 = vpack.c.bf16 %v289, %v287
  %v310 = vpack.c.bf16 %v290, %v288
  %v311 = vpack.c.bf16 %v293, %v291
  %v312 = vpack.c.bf16 %v294, %v292
  %v313 = vpack.c.bf16 %v297, %v295
  %v314 = vpack.c.bf16 %v298, %v296
  %v315 = vpack.c.bf16 %v301, %v299
  %v316 = vpack.c.bf16 %v302, %v300
  %v317 = vpack.c.bf16 %v303, %v303
  %v318 = vpack.c.bf16 %v304, %v304
  %v319 = vld [vmem:[%s3] sm:$0xf]
  %v320 = vld [vmem:[%s3 + $0x4] sm:$0xf]
  %v321 = vld [vmem:[%s3 + $0x8] sm:$0xf]
  %v322 = vld [vmem:[%s3 + $0xc] sm:$0xf]
  %v323 = vld [vmem:[%s3 + $0x10] sm:$0xf]
  %v324 = vld [vmem:[%s3 + $0x14] sm:$0xf]
  %v325 = vld [vmem:[%s3 + $0x18] sm:$0xf]
  %v326 = vld [vmem:[%s3 + $0x1c] sm:$0xf]
  %v327 = vld [vmem:[%s3 + $0x20] sm:$0xf]
  %v328 = vld [vmem:[%s3 + $0x24] sm:$0xf]
  %v329 = vld [vmem:[%s3 + $0x28] sm:$0xf]
  %v330 = vld [vmem:[%s3 + $0x2c] sm:$0xf]
  %v331 = vld [vmem:[%s3 + $0x30] sm:$0xf]
  %v332 = vld [vmem:[%s3 + $0x34] sm:$0xf]
  %v333 = vld [vmem:[%s3 + $0x38] sm:$0xf]
  %v334 = vld [vmem:[%s3 + $0x3c] sm:$0xf]
  %v335 = vld [vmem:[%s3 + $0x40] sm:$0xf]
  %v336 = vld [vmem:[%s3 + $0x44] sm:$0xf]
  %v337 = vld [vmem:[%s3 + $0x48] sm:$0xf]
  %v338 = vld [vmem:[%s3 + $0x4c] sm:$0xf]
  %v339 = vld [vmem:[%s3 + $0x50] sm:$0xf]
  %v340 = vld [vmem:[%s3 + $0x54] sm:$0xf]
  %v341 = vld [vmem:[%s3 + $0x58] sm:$0xf]
  %v342 = vld [vmem:[%s3 + $0x5c] sm:$0xf]
  %v343 = vld [vmem:[%s3 + $0x60] sm:$0xf]
  %v344 = vld [vmem:[%s3 + $0x64] sm:$0xf]
  %v345 = vld [vmem:[%s3 + $0x68] sm:$0xf]
  %v346 = vld [vmem:[%s3 + $0x6c] sm:$0xf]
  %v347 = vld [vmem:[%s3 + $0x70] sm:$0xf]
  %v348 = vld [vmem:[%s3 + $0x74] sm:$0xf]
  %v349 = vld [vmem:[%s3 + $0x78] sm:$0xf]
  %v350 = vld [vmem:[%s3 + $0x7c] sm:$0xf]
  %v351 = vld [vmem:[%s4] sm:$0x1]
  %v353 = vlaneseq
  %v354 = vshrl.u32 %v353, 7
  %v355 = vsub.s32 0, %v354
  %v356 = vrot.slane %v351, %v355
  %v390 = vunpack.c.l.b16 %v319
  %v391 = vunpack.c.l.b16 %v320
  %v392 = vunpack.c.l.b16 %v321
  %v393 = vunpack.c.l.b16 %v322
  %v394 = vunpack.c.l.b16 %v323
  %v395 = vunpack.c.l.b16 %v324
  %v396 = vunpack.c.l.b16 %v325
  %v397 = vunpack.c.l.b16 %v326
  %v398 = vunpack.c.l.b16 %v327
  %v399 = vunpack.c.l.b16 %v328
  %v400 = vunpack.c.l.b16 %v329
  %v401 = vunpack.c.l.b16 %v330
  %v402 = vunpack.c.l.b16 %v331
  %v403 = vunpack.c.l.b16 %v332
  %v404 = vunpack.c.l.b16 %v333
  %v405 = vunpack.c.l.b16 %v334
  %v406 = vunpack.c.l.b16 %v335
  %v407 = vunpack.c.l.b16 %v336
  %v408 = vunpack.c.l.b16 %v337
  %v409 = vunpack.c.l.b16 %v338
  %v410 = vunpack.c.l.b16 %v339
  %v411 = vunpack.c.l.b16 %v340
  %v412 = vunpack.c.l.b16 %v341
  %v413 = vunpack.c.l.b16 %v342
  %v414 = vunpack.c.l.b16 %v343
  %v415 = vunpack.c.l.b16 %v344
  %v416 = vunpack.c.l.b16 %v345
  %v417 = vunpack.c.l.b16 %v346
  %v418 = vunpack.c.l.b16 %v347
  %v419 = vunpack.c.l.b16 %v348
  %v420 = vunpack.c.l.b16 %v349
  %v421 = vunpack.c.l.b16 %v350
  %v422 = vpack.c.b16 %v391, %v390
  %v423 = vpack.c.b16 %v393, %v392
  %v424 = vpack.c.b16 %v395, %v394
  %v425 = vpack.c.b16 %v397, %v396
  %v426 = vpack.c.b16 %v399, %v398
  %v427 = vpack.c.b16 %v401, %v400
  %v428 = vpack.c.b16 %v403, %v402
  %v429 = vpack.c.b16 %v405, %v404
  %v430 = vpack.c.b16 %v407, %v406
  %v431 = vpack.c.b16 %v409, %v408
  %v432 = vpack.c.b16 %v411, %v410
  %v433 = vpack.c.b16 %v413, %v412
  %v434 = vpack.c.b16 %v415, %v414
  %v435 = vpack.c.b16 %v417, %v416
  %v436 = vpack.c.b16 %v419, %v418
  %v437 = vpack.c.b16 %v421, %v420
  %454 = vmatprep.subr.bf16.mxu0 0
  %455 = vmatpush1.bf16.msra.mxu0 %v422
  %456 = vmatprep.subr.bf16.mxu0 0
  %457 = vmatpush1.bf16.msra.mxu0 %v423
  %458 = vmatprep.subr.bf16.mxu0 0
  %459 = vmatpush1.bf16.msra.mxu0 %v424
  %460 = vmatprep.subr.bf16.mxu0 0
  %461 = vmatpush1.bf16.msra.mxu0 %v425
  %462 = vmatprep.subr.bf16.mxu0 0
  %463 = vmatpush1.bf16.msra.mxu0 %v426
  %464 = vmatprep.subr.bf16.mxu0 0
  %465 = vmatpush1.bf16.msra.mxu0 %v427
  %466 = vmatprep.subr.bf16.mxu0 0
  %467 = vmatpush1.bf16.msra.mxu0 %v428
  %468 = vmatprep.subr.bf16.mxu0 0
  %469 = vmatpush1.bf16.msra.mxu0 %v429
  %470 = vmatprep.subr.bf16.mxu0 0
  %471 = vmatpush1.bf16.msra.mxu0 %v430
  %472 = vmatprep.subr.bf16.mxu0 0
  %473 = vmatpush1.bf16.msra.mxu0 %v431
  %474 = vmatprep.subr.bf16.mxu0 0
  %475 = vmatpush1.bf16.msra.mxu0 %v432
  %476 = vmatprep.subr.bf16.mxu0 0
  %477 = vmatpush1.bf16.msra.mxu0 %v433
  %478 = vmatprep.subr.bf16.mxu0 0
  %479 = vmatpush1.bf16.msra.mxu0 %v434
  %480 = vmatprep.subr.bf16.mxu0 0
  %481 = vmatpush1.bf16.msra.mxu0 %v435
  %482 = vmatprep.subr.bf16.mxu0 0
  %483 = vmatpush1.bf16.msra.mxu0 %v436
  %484 = vmatprep.subr.bf16.mxu0 0
  %485 = vmatpush1.bf16.msra.mxu0 %v437
  %486 = vmatprep.mubr.bf16.mxu0 %v306
  %487 = vmatmul.mubr.bf16.gmra.mrb[0].mxu0 %v305
  %v488 = vpop.f32.mrb[0].mxu0
  %v489 = vadd.f32 %v356, %v488
  %v490 = vpop.f32.mrb[0].mxu0
  %v491 = vpop.f32.mrb[0].mxu0
  %v492 = vadd.f32 %v356, %v491
  %v493 = vpop.f32.mrb[0].mxu0
  %494 = vmatprep.mubr.bf16.mxu0 %v308
  %495 = vmatmul.mubr.bf16.gmra.mrb[0].mxu0 %v307
  %v496 = vpop.f32.mrb[0].mxu0
  %v497 = vadd.f32 %v356, %v496
  %v498 = vpop.f32.mrb[0].mxu0
  %v499 = vpop.f32.mrb[0].mxu0
  %v500 = vadd.f32 %v356, %v499
  %v501 = vpop.f32.mrb[0].mxu0
  %502 = vmatprep.mubr.bf16.mxu0 %v310
  %503 = vmatmul.mubr.bf16.gmra.mrb[0].mxu0 %v309
  %v504 = vpop.f32.mrb[0].mxu0
  %v505 = vadd.f32 %v356, %v504
  %v506 = vpop.f32.mrb[0].mxu0
  %v507 = vpop.f32.mrb[0].mxu0
  %v508 = vadd.f32 %v356, %v507
  %v509 = vpop.f32.mrb[0].mxu0
  %510 = vmatprep.mubr.bf16.mxu0 %v312
  %511 = vmatmul.mubr.bf16.gmra.mrb[0].mxu0 %v311
  %v512 = vpop.f32.mrb[0].mxu0
  %v513 = vadd.f32 %v356, %v512
  %v514 = vpop.f32.mrb[0].mxu0
  %v515 = vpop.f32.mrb[0].mxu0
  %v516 = vadd.f32 %v356, %v515
  %v517 = vpop.f32.mrb[0].mxu0
  %518 = vmatprep.mubr.bf16.mxu0 %v314
  %519 = vmatmul.mubr.bf16.gmra.mrb[0].mxu0 %v313
  %v520 = vpop.f32.mrb[0].mxu0
  %v521 = vadd.f32 %v356, %v520
  %v522 = vpop.f32.mrb[0].mxu0
  %v523 = vpop.f32.mrb[0].mxu0
  %v524 = vadd.f32 %v356, %v523
  %v525 = vpop.f32.mrb[0].mxu0
  %526 = vmatprep.mubr.bf16.mxu0 %v316
  %527 = vmatmul.mubr.bf16.gmra.mrb[0].mxu0 %v315
  %v528 = vpop.f32.mrb[0].mxu0
  %v529 = vadd.f32 %v356, %v528
  %v530 = vpop.f32.mrb[0].mxu0
  %v531 = vpop.f32.mrb[0].mxu0
  %v532 = vadd.f32 %v356, %v531
  %v533 = vpop.f32.mrb[0].mxu0
  %534 = vmatprep.mubr.bf16.mxu0 %v318
  %535 = vmatmul.mubr.bf16.gmra.mrb[0].mxu0 %v317
  %v536 = vpop.f32.mrb[0].mxu0
  %v537 = vadd.f32 %v356, %v536
  %v538 = vpop.f32.mrb[0].mxu0
  %v539 = vpop.f32.mrb[0].mxu0
  %v540 = vpop.f32.mrb[0].mxu0
  %541 = vdwg.mxu0
  %v542 = vmax.f32 %v489, 0.0
  %v543 = vmax.f32 %v492, 0.0
  %v544 = vmax.f32 %v497, 0.0
  %v545 = vmax.f32 %v500, 0.0
  %v546 = vmax.f32 %v505, 0.0
  %v547 = vmax.f32 %v508, 0.0
  %v548 = vmax.f32 %v513, 0.0
  %v549 = vmax.f32 %v516, 0.0
  %v550 = vmax.f32 %v521, 0.0
  %v551 = vmax.f32 %v524, 0.0
  %v552 = vmax.f32 %v529, 0.0
  %v553 = vmax.f32 %v532, 0.0
  %v554 = vmax.f32 %v537, 0.0
  %v555 = vpack.c.bf16 %v543, %v542
  %v556 = vpack.c.bf16 %v545, %v544
  %v557 = vpack.c.bf16 %v547, %v546
  %v558 = vpack.c.bf16 %v549, %v548
  %v559 = vpack.c.bf16 %v551, %v550
  %v560 = vpack.c.bf16 %v553, %v552
  %v561 = vpack.c.bf16 %v554, %v554
  %v562 = vld [vmem:[%s5] sm:$0xf]
  %v563 = vld [vmem:[%s5 + $0x4] sm:$0xf]
  %v564 = vld [vmem:[%s5 + $0x8] sm:$0xf]
  %v565 = vld [vmem:[%s5 + $0xc] sm:$0xf]
  %v566 = vld [vmem:[%s5 + $0x10] sm:$0xf]
  %v567 = vld [vmem:[%s5 + $0x14] sm:$0xf]
  %v568 = vld [vmem:[%s5 + $0x18] sm:$0xf]
  %v569 = vld [vmem:[%s5 + $0x1c] sm:$0xf]
  %v570 = vld [vmem:[%s6] sm:$0x1]
  %v572 = vlaneseq
  %v573 = vshrl.u32 %v572, 7
  %v574 = vsub.s32 0, %v573
  %v575 = vrot.slane %v570, %v574
  %v585 = vunpack.c.l.b16 %v562
  %v586 = vunpack.c.l.b16 %v563
  %v587 = vunpack.c.l.b16 %v564
  %v588 = vunpack.c.l.b16 %v565
  %v589 = vunpack.c.l.b16 %v566
  %v590 = vunpack.c.l.b16 %v567
  %v591 = vunpack.c.l.b16 %v568
  %v592 = vunpack.c.l.b16 %v569
  %v593 = vpack.c.b16 %v586, %v585
  %v594 = vpack.c.b16 %v588, %v587
  %v595 = vpack.c.b16 %v590, %v589
  %v596 = vpack.c.b16 %v592, %v591
  %vm601 = vcmask 523264
  %v603 = vsel %vm601, %v555, 0
  %v606 = vsel %vm601, %v556, 0
  %v609 = vsel %vm601, %v557, 0
  %v612 = vsel %vm601, %v558, 0
  %v615 = vsel %vm601, %v559, 0
  %v618 = vsel %vm601, %v560, 0
  %v621 = vsel %vm601, %v561, 0
  %623 = vmatprep.subr.bf16.mxu0 0
  %624 = vmatpush1.bf16.msra.mxu0 %v593
  %625 = vmatprep.subr.bf16.mxu0 0
  %626 = vmatpush1.bf16.msra.mxu0 %v594
  %627 = vmatprep.subr.bf16.mxu0 0
  %628 = vmatpush1.bf16.msra.mxu0 %v595
  %629 = vmatprep.subr.bf16.mxu0 0
  %630 = vmatpush1.bf16.msra.mxu0 %v596
  %631 = vmatprep.subr.bf16.mxu0 0
  %632 = vmatpush1.bf16.msra.mxu0 0
  %633 = vmatprep.subr.bf16.mxu0 0
  %634 = vmatpush1.bf16.msra.mxu0 0
  %635 = vmatprep.subr.bf16.mxu0 0
  %636 = vmatpush1.bf16.msra.mxu0 0
  %637 = vmatprep.subr.bf16.mxu0 0
  %638 = vmatpush1.bf16.msra.mxu0 0
  %639 = vmatprep.subr.bf16.mxu0 0
  %640 = vmatpush1.bf16.msra.mxu0 0
  %641 = vmatprep.subr.bf16.mxu0 0
  %642 = vmatpush1.bf16.msra.mxu0 0
  %643 = vmatprep.subr.bf16.mxu0 0
  %644 = vmatpush1.bf16.msra.mxu0 0
  %645 = vmatprep.subr.bf16.mxu0 0
  %646 = vmatpush1.bf16.msra.mxu0 0
  %647 = vmatprep.subr.bf16.mxu0 0
  %648 = vmatpush1.bf16.msra.mxu0 0
  %649 = vmatprep.subr.bf16.mxu0 0
  %650 = vmatpush1.bf16.msra.mxu0 0
  %651 = vmatprep.subr.bf16.mxu0 0
  %652 = vmatpush1.bf16.msra.mxu0 0
  %653 = vmatprep.subr.bf16.mxu0 0
  %654 = vmatpush1.bf16.msra.mxu0 0
  %655 = vmatprep.mubr.bf16.mxu0 0
  %656 = vmatmul.mubr.bf16.gmra.mrb[0].mxu0 %v603
  %v657 = vpop.f32.mrb[0].mxu0
  %v658 = vadd.f32 %v575, %v657
  %v659 = vpop.f32.mrb[0].mxu0
  %v660 = vpop.f32.mrb[0].mxu0
  %v661 = vadd.f32 %v575, %v660
  %v662 = vpop.f32.mrb[0].mxu0
  %663 = vmatprep.mubr.bf16.mxu0 0
  %664 = vmatmul.mubr.bf16.gmra.mrb[0].mxu0 %v606
  %v665 = vpop.f32.mrb[0].mxu0
  %v666 = vadd.f32 %v575, %v665
  %v667 = vpop.f32.mrb[0].mxu0
  %v668 = vpop.f32.mrb[0].mxu0
  %v669 = vadd.f32 %v575, %v668
  %v670 = vpop.f32.mrb[0].mxu0
  %671 = vmatprep.mubr.bf16.mxu0 0
  %672 = vmatmul.mubr.bf16.gmra.mrb[0].mxu0 %v609
  %v673 = vpop.f32.mrb[0].mxu0
  %v674 = vadd.f32 %v575, %v673
  %v675 = vpop.f32.mrb[0].mxu0
  %v676 = vpop.f32.mrb[0].mxu0
  %v677 = vadd.f32 %v575, %v676
  %v678 = vpop.f32.mrb[0].mxu0
  %679 = vmatprep.mubr.bf16.mxu0 0
  %680 = vmatmul.mubr.bf16.gmra.mrb[0].mxu0 %v612
  %v681 = vpop.f32.mrb[0].mxu0
  %v682 = vadd.f32 %v575, %v681
  %v683 = vpop.f32.mrb[0].mxu0
  %v684 = vpop.f32.mrb[0].mxu0
  %v685 = vadd.f32 %v575, %v684
  %v686 = vpop.f32.mrb[0].mxu0
  %687 = vmatprep.mubr.bf16.mxu0 0
  %688 = vmatmul.mubr.bf16.gmra.mrb[0].mxu0 %v615
  %v689 = vpop.f32.mrb[0].mxu0
  %v690 = vadd.f32 %v575, %v689
  %v691 = vpop.f32.mrb[0].mxu0
  %v692 = vpop.f32.mrb[0].mxu0
  %v693 = vadd.f32 %v575, %v692
  %v694 = vpop.f32.mrb[0].mxu0
  %695 = vmatprep.mubr.bf16.mxu0 0
  %696 = vmatmul.mubr.bf16.gmra.mrb[0].mxu0 %v618
  %v697 = vpop.f32.mrb[0].mxu0
  %v698 = vadd.f32 %v575, %v697
  %v699 = vpop.f32.mrb[0].mxu0
  %v700 = vpop.f32.mrb[0].mxu0
  %v701 = vadd.f32 %v575, %v700
  %v702 = vpop.f32.mrb[0].mxu0
  %703 = vmatprep.mubr.bf16.mxu0 0
  %704 = vmatmul.mubr.bf16.gmra.mrb[0].mxu0 %v621
  %v705 = vpop.f32.mrb[0].mxu0
  %v706 = vadd.f32 %v575, %v705
  %v707 = vpop.f32.mrb[0].mxu0
  %v708 = vpop.f32.mrb[0].mxu0
  %v709 = vpop.f32.mrb[0].mxu0
  %710 = vdwg.mxu0
  %v711 = vmax.f32 %v658, 0.0
  %v712 = vmax.f32 %v661, 0.0
  %v713 = vmax.f32 %v666, 0.0
  %v714 = vmax.f32 %v669, 0.0
  %v715 = vmax.f32 %v674, 0.0
  %v716 = vmax.f32 %v677, 0.0
  %v717 = vmax.f32 %v682, 0.0
  %v718 = vmax.f32 %v685, 0.0
  %v719 = vmax.f32 %v690, 0.0
  %v720 = vmax.f32 %v693, 0.0
  %v721 = vmax.f32 %v698, 0.0
  %v722 = vmax.f32 %v701, 0.0
  %v723 = vmax.f32 %v706, 0.0
  %v724 = vlaneseq
  %v725 = vand.u32 %v724, 127
  %vm726 = vcmp.lt.s32.totalorder %v725, 3
  %v727 = vsel %vm726, %v711, -inf
  %v728 = vsel %vm726, %v712, -inf
  %v729 = vsel %vm726, %v713, -inf
  %v730 = vsel %vm726, %v714, -inf
  %v731 = vsel %vm726, %v715, -inf
  %v732 = vsel %vm726, %v716, -inf
  %v733 = vsel %vm726, %v717, -inf
  %v734 = vsel %vm726, %v718, -inf
  %v735 = vsel %vm726, %v719, -inf
  %v736 = vsel %vm726, %v720, -inf
  %v737 = vsel %vm726, %v721, -inf
  %v738 = vsel %vm726, %v722, -inf
  %v739 = vsel %vm726, %v723, -inf
  %vm740 = vcmask 64512
  %v741 = vsel %vm740, %v727, -inf
  %742 = vmax.xlane.f32.xlu0 %v741
  %v743 = vpop.xlane.xlu0 %742
  %v744 = vsel %vm740, %v728, -inf
  %745 = vmax.xlane.f32.xlu0 %v744
  %v746 = vpop.xlane.xlu0 %745
  %v747 = vsel %vm740, %v729, -inf
  %748 = vmax.xlane.f32.xlu0 %v747
  %v749 = vpop.xlane.xlu0 %748
  %v750 = vsel %vm740, %v730, -inf
  %751 = vmax.xlane.f32.xlu0 %v750
  %v752 = vpop.xlane.xlu0 %751
  %v753 = vsel %vm740, %v731, -inf
  %754 = vmax.xlane.f32.xlu0 %v753
  %v755 = vpop.xlane.xlu0 %754
  %v756 = vsel %vm740, %v732, -inf
  %757 = vmax.xlane.f32.xlu0 %v756
  %v758 = vpop.xlane.xlu0 %757
  %v759 = vsel %vm740, %v733, -inf
  %760 = vmax.xlane.f32.xlu0 %v759
  %v761 = vpop.xlane.xlu0 %760
  %v762 = vsel %vm740, %v734, -inf
  %763 = vmax.xlane.f32.xlu0 %v762
  %v764 = vpop.xlane.xlu0 %763
  %v765 = vsel %vm740, %v735, -inf
  %766 = vmax.xlane.f32.xlu0 %v765
  %v767 = vpop.xlane.xlu0 %766
  %v768 = vsel %vm740, %v736, -inf
  %769 = vmax.xlane.f32.xlu0 %v768
  %v770 = vpop.xlane.xlu0 %769
  %v771 = vsel %vm740, %v737, -inf
  %772 = vmax.xlane.f32.xlu0 %v771
  %v773 = vpop.xlane.xlu0 %772
  %v774 = vsel %vm740, %v738, -inf
  %775 = vmax.xlane.f32.xlu0 %v774
  %v776 = vpop.xlane.xlu0 %775
  %v777 = vsel %vm740, %v739, -inf
  %778 = vmax.xlane.f32.xlu0 %v777
  %v779 = vpop.xlane.xlu0 %778
  %v780 = vsub.f32 %v727, %v743
  %v781 = vsub.f32 %v728, %v746
  %v782 = vsub.f32 %v729, %v749
  %v783 = vsub.f32 %v730, %v752
  %v784 = vsub.f32 %v731, %v755
  %v785 = vsub.f32 %v732, %v758
  %v786 = vsub.f32 %v733, %v761
  %v787 = vsub.f32 %v734, %v764
  %v788 = vsub.f32 %v735, %v767
  %v789 = vsub.f32 %v736, %v770
  %v790 = vsub.f32 %v737, %v773
  %v791 = vsub.f32 %v738, %v776
  %v792 = vsub.f32 %v739, %v779
  %v793 = vmul.f32 %v780, 1.442695
  %v794 = vpow.pop %v793
  %v795 = vmul.f32 %v781, 1.442695
  %v796 = vpow.pop %v795
  %v797 = vmul.f32 %v782, 1.442695
  %v798 = vpow.pop %v797
  %v799 = vmul.f32 %v783, 1.442695
  %v800 = vpow.pop %v799
  %v801 = vmul.f32 %v784, 1.442695
  %v802 = vpow.pop %v801
  %v803 = vmul.f32 %v785, 1.442695
  %v804 = vpow.pop %v803
  %v805 = vmul.f32 %v786, 1.442695
  %v806 = vpow.pop %v805
  %v807 = vmul.f32 %v787, 1.442695
  %v808 = vpow.pop %v807
  %v809 = vmul.f32 %v788, 1.442695
  %v810 = vpow.pop %v809
  %v811 = vmul.f32 %v789, 1.442695
  %v812 = vpow.pop %v811
  %v813 = vmul.f32 %v790, 1.442695
  %v814 = vpow.pop %v813
  %v815 = vmul.f32 %v791, 1.442695
  %v816 = vpow.pop %v815
  %v817 = vmul.f32 %v792, 1.442695
  %v818 = vpow.pop %v817
  %v819 = vsel %vm740, %v794, 0.0
  %820 = vadd.xlane.f32.xlu0 %v819
  %v821 = vpop.xlane.xlu0 %820
  %v822 = vsel %vm740, %v796, 0.0
  %823 = vadd.xlane.f32.xlu0 %v822
  %v824 = vpop.xlane.xlu0 %823
  %v825 = vsel %vm740, %v798, 0.0
  %826 = vadd.xlane.f32.xlu0 %v825
  %v827 = vpop.xlane.xlu0 %826
  %v828 = vsel %vm740, %v800, 0.0
  %829 = vadd.xlane.f32.xlu0 %v828
  %v830 = vpop.xlane.xlu0 %829
  %v831 = vsel %vm740, %v802, 0.0
  %832 = vadd.xlane.f32.xlu0 %v831
  %v833 = vpop.xlane.xlu0 %832
  %v834 = vsel %vm740, %v804, 0.0
  %835 = vadd.xlane.f32.xlu0 %v834
  %v836 = vpop.xlane.xlu0 %835
  %v837 = vsel %vm740, %v806, 0.0
  %838 = vadd.xlane.f32.xlu0 %v837
  %v839 = vpop.xlane.xlu0 %838
  %v840 = vsel %vm740, %v808, 0.0
  %841 = vadd.xlane.f32.xlu0 %v840
  %v842 = vpop.xlane.xlu0 %841
  %v843 = vsel %vm740, %v810, 0.0
  %844 = vadd.xlane.f32.xlu0 %v843
  %v845 = vpop.xlane.xlu0 %844
  %v846 = vsel %vm740, %v812, 0.0
  %847 = vadd.xlane.f32.xlu0 %v846
  %v848 = vpop.xlane.xlu0 %847
  %v849 = vsel %vm740, %v814, 0.0
  %850 = vadd.xlane.f32.xlu0 %v849
  %v851 = vpop.xlane.xlu0 %850
  %v852 = vsel %vm740, %v816, 0.0
  %853 = vadd.xlane.f32.xlu0 %v852
  %v854 = vpop.xlane.xlu0 %853
  %v855 = vsel %vm740, %v818, 0.0
  %856 = vadd.xlane.f32.xlu0 %v855
  %v857 = vpop.xlane.xlu0 %856
  %v858 = vrcp.pop %v821
  %v859 = vrcp.pop %v824
  %v860 = vrcp.pop %v827
  %v861 = vrcp.pop %v830
  %v862 = vrcp.pop %v833
  %v863 = vrcp.pop %v836
  %v864 = vrcp.pop %v839
  %v865 = vrcp.pop %v842
  %v866 = vrcp.pop %v845
  %v867 = vrcp.pop %v848
  %v868 = vrcp.pop %v851
  %v869 = vrcp.pop %v854
  %v870 = vrcp.pop %v857
  %v871 = vmul.f32 %v794, %v858
  %v872 = vmul.f32 %v796, %v859
  %v873 = vmul.f32 %v798, %v860
  %v874 = vmul.f32 %v800, %v861
  %v875 = vmul.f32 %v802, %v862
  %v876 = vmul.f32 %v804, %v863
  %v877 = vmul.f32 %v806, %v864
  %v878 = vmul.f32 %v808, %v865
  %v879 = vmul.f32 %v810, %v866
  %v880 = vmul.f32 %v812, %v867
  %v881 = vmul.f32 %v814, %v868
  %v882 = vmul.f32 %v816, %v869
  %v883 = vmul.f32 %v818, %v870
  %884 = vst.msk [vmem:[%s7] sm:$0xff] %vm740, %v871
  %885 = vst.msk [vmem:[%s7 + $0x8] sm:$0xff] %vm740, %v872
  %886 = vst.msk [vmem:[%s7 + $0x10] sm:$0xff] %vm740, %v873
  %887 = vst.msk [vmem:[%s7 + $0x18] sm:$0xff] %vm740, %v874
  %888 = vst.msk [vmem:[%s7 + $0x20] sm:$0xff] %vm740, %v875
  %889 = vst.msk [vmem:[%s7 + $0x28] sm:$0xff] %vm740, %v876
  %890 = vst.msk [vmem:[%s7 + $0x30] sm:$0xff] %vm740, %v877
  %891 = vst.msk [vmem:[%s7 + $0x38] sm:$0xff] %vm740, %v878
  %892 = vst.msk [vmem:[%s7 + $0x40] sm:$0xff] %vm740, %v879
  %893 = vst.msk [vmem:[%s7 + $0x48] sm:$0xff] %vm740, %v880
  %894 = vst.msk [vmem:[%s7 + $0x50] sm:$0xff] %vm740, %v881
  %895 = vst.msk [vmem:[%s7 + $0x58] sm:$0xff] %vm740, %v882
  %896 = vst.msk [vmem:[%s7 + $0x60] sm:$0xff] %vm740, %v883
  // Predicated region
  $region30: #{tpu_custom_call.1} parent=0 // pred_check
    _
  $region31: #{tpu_custom_call.1} parent=0 // pred_check_branch
    %898 = sbr.rel (0) target = $region33
  $region32: #{tpu_custom_call.1} parent=0 // pred_region
    _
  $region33: #{tpu_custom_call.1} parent=0 // pred_fallthru
    _
  // Predicated region
  $region34: #{tpu_custom_call.1} parent=0 // pred_check
    _
  $region35: #{tpu_custom_call.1} parent=0 // pred_check_branch
    %900 = sbr.rel (0) target = $region37
  $region36: #{tpu_custom_call.1} parent=0 // pred_region
    _
  $region37: #{tpu_custom_call.1} parent=0 // pred_fallthru
    _

</llo_original>
